<compile_context>
chip_gen: v7x
topology: tpu7x:2x2x1
jax: 0.10.0
libtpu: 0.0.40
codegen_flags: <defaults>
</compile_context>

<pallas_src>
import functools

import jax
import jax.numpy as jnp
from jax import lax
from jax.experimental import pallas as pl
from jax.experimental.pallas import tpu as pltpu


def _round_up(x, m):
    return (x + m - 1) // m * m


def _sublane_multiple(dtype):
    # sublane packing of the (second-minor) dim: f32 -> 8, bf16 -> 16, int8/fp8 -> 32
    itemsize = jnp.dtype(dtype).itemsize
    return max(8, 8 * (4 // max(1, itemsize)))


def _vmem_limit_bytes(needed):
    # Generous headroom over what we actually use, but never above v7x's 64 MiB
    # physical per-TC VMEM (v5e/v6e have 128 MiB, so this is safe everywhere).
    return int(min(64 * 2**20, max(32 * 2**20, 2 * needed)))


# ---------------------------------------------------------------------------
# Path 1: small table resident in VMEM, gather = one-hot matmul on the MXU.
# ---------------------------------------------------------------------------
def _vmem_onehot_kernel(ids_ref, table_ref, o_ref):
    """ids_ref: (tpb, 1) int32 VMEM; table_ref: (V, H_pad) VMEM; o_ref: (tpb, H_pad)."""
    ids = ids_ref[...]                                               # (tpb, 1)
    vocab = table_ref.shape[0]
    col = lax.broadcasted_iota(jnp.int32, (ids.shape[0], vocab), 1)  # (tpb, V)
    onehot = (col == ids).astype(table_ref.dtype)                    # exactly 0/1
    o_ref[...] = jnp.dot(
        onehot,
        table_ref[...],
        preferred_element_type=jnp.float32,
        precision=lax.Precision.HIGHEST,
    ).astype(o_ref.dtype)


# ---------------------------------------------------------------------------
# Path 2: table in HBM, per-row async DMA gather straight into the output block.
# ---------------------------------------------------------------------------
def _hbm_gather_kernel(ids_ref, table_ref, o_ref, copy_sem,
                       *, tokens_per_block, dma_unroll):
    """One grid step: gather `tokens_per_block` rows from the HBM table.

    ids_ref   : (tokens_per_block,) int32 SMEM block for this grid step
    table_ref : (vocab, hidden) in HBM (pl.ANY) -- manual DMA source
    o_ref     : (tokens_per_block, hidden) VMEM output block (Pallas double-buffered)
    copy_sem  : single shared DMA semaphore
    """

    def _issue(t, carry):
        row = ids_ref[t]                        # scalar read from SMEM
        pltpu.make_async_copy(
            table_ref.at[pl.ds(row, 1)],        # (1, hidden) HBM row
            o_ref.at[pl.ds(t, 1)],              # DMA straight into the output block
            copy_sem,
        ).start()
        return carry

    # Issue every row DMA before waiting on any -> deep DMA queue, and all SMEM id
    # reads happen before any wait (waits break SMEM sst->sld forwarding).
    lax.fori_loop(0, tokens_per_block, _issue, 0, unroll=dma_unroll)

    def _drain(t, carry):
        # Wait descriptors only need the transfer shape + semaphore; the indices
        # here are dummies with the same (1, hidden) shape as the real copies.
        pltpu.make_async_copy(
            table_ref.at[pl.ds(0, 1)],
            o_ref.at[pl.ds(0, 1)],
            copy_sem,
        ).wait()
        return carry

    lax.fori_loop(0, tokens_per_block, _drain, 0, unroll=dma_unroll)


# ---------------------------------------------------------------------------
# Wrapper: nn.Embedding(input_ids) -> (..., hidden)
# ---------------------------------------------------------------------------
def embedding_lookup(table, input_ids, *, tokens_per_block=256,
                     table_vmem_budget_bytes=4 * 2**20,
                     force_hbm_gather=False):
    V, H = table.shape
    lead_shape = tuple(input_ids.shape)
    n = 1
    for d in lead_shape:
        n *= int(d)
    dtype_bytes = jnp.dtype(table.dtype).itemsize

    sub = _sublane_multiple(table.dtype)
    # Token block: big enough to amortize per-grid-step overhead, a multiple of the
    # sublane packing, but not much bigger than the actual token count, and capped
    # so the double-buffered output block stays well inside VMEM.
    tpb = max(sub, min(_round_up(tokens_per_block, sub), _round_up(n, sub)))
    vmem_cap_tokens = max(sub, ((16 * 2**20) // max(1, 2 * H * dtype_bytes)) // sub * sub)
    tpb = min(tpb, vmem_cap_tokens)

    n_blocks = (n + tpb - 1) // tpb
    n_pad = n_blocks * tpb

    ids = input_ids.reshape(n).astype(jnp.int32)
    if n_pad != n:
        # Pad with a valid row index (0); padded rows are sliced away below.
        ids = jnp.concatenate([ids, jnp.zeros((n_pad - n,), jnp.int32)])

    use_vmem_table = (
        not force_hbm_gather
        and V <= 4096
        and V * _round_up(H, 128) * dtype_bytes <= table_vmem_budget_bytes
    )

    if use_vmem_table:
        # --- fast path: VMEM-resident table + one-hot MXU gather -------------
        H_pad = _round_up(H, 128)   # lane-dense output block (unmasked stores)
        table_k = table if H_pad == H else jnp.pad(table, ((0, 0), (0, H_pad - H)))
        ids2d = ids.reshape(n_pad, 1)
        vmem_need = (V * H_pad * dtype_bytes        # resident table
                     + 3 * tpb * H_pad * 4          # out double-buffer + f32 result
                     + 2 * tpb * V * 4              # one-hot intermediate
                     + 2 * tpb * 128 * 4)           # ids blocks

        out = pl.pallas_call(
            _vmem_onehot_kernel,
            out_shape=jax.ShapeDtypeStruct((n_pad, H_pad), table.dtype),
            grid_spec=pltpu.PrefetchScalarGridSpec(
                num_scalar_prefetch=0,
                grid=(n_blocks,),
                in_specs=[
                    pl.BlockSpec((tpb, 1), lambda i: (i, 0)),
                    pl.BlockSpec((V, H_pad), lambda i: (0, 0)),   # table stays resident
                ],
                out_specs=pl.BlockSpec((tpb, H_pad), lambda i: (i, 0)),
            ),
            compiler_params=pltpu.CompilerParams(
                dimension_semantics=("parallel",),
                vmem_limit_bytes=_vmem_limit_bytes(vmem_need),
            ),
        )(ids2d, table_k)
        out = out[:n, :H]
    else:
        # --- HBM gather path: per-row async DMA straight into the output -----
        dma_unroll = 8
        vmem_need = 2 * tpb * H * dtype_bytes + 4 * tpb

        out = pl.pallas_call(
            functools.partial(_hbm_gather_kernel,
                              tokens_per_block=tpb, dma_unroll=dma_unroll),
            out_shape=jax.ShapeDtypeStruct((n_pad, H), table.dtype),
            grid_spec=pltpu.PrefetchScalarGridSpec(
                num_scalar_prefetch=0,
                grid=(n_blocks,),
                in_specs=[
                    pl.BlockSpec((tpb,), lambda i: (i,),
                                 memory_space=pltpu.MemorySpace.SMEM),  # per-block ids
                    pl.BlockSpec(memory_space=pl.ANY),                  # table in HBM
                ],
                out_specs=pl.BlockSpec((tpb, H), lambda i: (i, 0)),
                scratch_shapes=[pltpu.SemaphoreType.DMA],               # one shared sem
            ),
            compiler_params=pltpu.CompilerParams(
                dimension_semantics=("parallel",),
                vmem_limit_bytes=_vmem_limit_bytes(vmem_need),
            ),
        )(ids, table)
        out = out[:n]

    return out.reshape(*lead_shape, H)


if __name__ == "__main__":
    # Config mirroring EmbeddingLayer(config): vocab_size, hidden_size, dtype.
    class Config:
        vocab_size = 64
        hidden_size = 32
        dtype = jnp.float32

    cfg = Config()
    B, S = 2, 8

    key = jax.random.PRNGKey(0)
    wkey, ikey = jax.random.split(key)
    table = jax.random.normal(wkey, (cfg.vocab_size, cfg.hidden_size),
                              dtype=cfg.dtype)
    input_ids = jax.random.randint(ikey, (B, S), 0, cfg.vocab_size,
                                   dtype=jnp.int32)

    ref = jnp.take(table, input_ids, axis=0)

    # Path 1 (auto-selected for this small table): VMEM-resident one-hot MXU gather.
    fwd_fast = jax.jit(embedding_lookup)
    out_fast = jax.block_until_ready(fwd_fast(table, input_ids))
    assert out_fast.shape == (B, S, cfg.hidden_size)
    assert out_fast.dtype == table.dtype
    # f32 MXU matmuls may round through bf16 passes depending on precision support,
    # so allow a small tolerance here; the DMA path below is checked bit-exactly.
    assert bool(jnp.allclose(out_fast, ref, rtol=1e-2, atol=1e-2))

    # Path 2 (forced): HBM per-row async-DMA gather (what large tables use).
    fwd_hbm = jax.jit(functools.partial(embedding_lookup, force_hbm_gather=True))
    out_hbm = jax.block_until_ready(fwd_hbm(table, input_ids))
    assert out_hbm.shape == (B, S, cfg.hidden_size)
    assert out_hbm.dtype == table.dtype
    assert bool(jnp.all(out_hbm == ref))

    print("KERNEL_OK")
</pallas_src>

<mosaic_0001>
module attributes {stable_mosaic.version = 11 : i64} {
  func.func @_vmem_onehot_kernel(%arg0: i32, %arg1: memref<16x1xi32, #tpu.memory_space<vmem>>, %arg2: memref<64x128xf32, #tpu.memory_space<vmem>>, %arg3: memref<16x128xf32, #tpu.memory_space<vmem>>) attributes {dimension_semantics = [#tpu.dimension_semantics<parallel>], iteration_bounds = array<i64: 1>, scalar_prefetch = 0 : i64, scratch_operands = 0 : i64, tpu.core_type = #tpu.core_type<tc>, window_params = [{transform_indices = @transform_0, window_bounds = array<i64: 16, 1>}, {pipeline_mode = #tpu.pipeline_mode<synchronous>, transform_indices = @transform_1, window_bounds = array<i64: 64, 128>}, {transform_indices = @transform_2, window_bounds = array<i64: 16, 128>}]} {
    %c0 = arith.constant 0 : index
    %c0_0 = arith.constant 0 : index
    %0 = vector.load %arg1[%c0, %c0_0] : memref<16x1xi32, #tpu.memory_space<vmem>>, vector<16x1xi32>
    %1 = tpu.iota {dimensions = array<i32: 1>} : vector<16x64xi32>
    %2 = vector.broadcast %0 : vector<16x1xi32> to vector<16x64xi32>
    %3 = arith.cmpi eq, %1, %2 : vector<16x64xi32>
    %4 = arith.extui %3 : vector<16x64xi1> to vector<16x64xi32>
    %5 = arith.sitofp %4 : vector<16x64xi32> to vector<16x64xf32>
    %c0_1 = arith.constant 0 : index
    %c0_2 = arith.constant 0 : index
    %6 = vector.load %arg2[%c0_1, %c0_2] : memref<64x128xf32, #tpu.memory_space<vmem>>, vector<64x128xf32>
    %cst = arith.constant dense<0.000000e+00> : vector<16x128xf32>
    %7 = tpu.matmul %5, %6, %cst {dimension_numbers = #tpu.dot_dimension_numbers<[1], [0], [0], [1], [0, 0, 1, 1], [], []>, precision = #tpu.contract_precision<fp32>} : vector<16x64xf32>, vector<64x128xf32>, vector<16x128xf32> -> vector<16x128xf32>
    %c0_3 = arith.constant 0 : index
    %c0_4 = arith.constant 0 : index
    %8 = vector.load %arg3[%c0_3, %c0_4] : memref<16x128xf32, #tpu.memory_space<vmem>>, vector<16x128xf32>
    tpu.vector_store %arg3[%c0_3, %c0_4], %7 {strides = array<i32>} : memref<16x128xf32, #tpu.memory_space<vmem>>, vector<16x128xf32>,
    return
  }
  func.func @transform_0(%arg0: i32) -> (i32, i32) {
    %c0_i32 = arith.constant 0 : i32
    %c0_i32_0 = arith.constant 0 : i32
    return %arg0, %c0_i32 : i32, i32
  }
  func.func @transform_1(%arg0: i32) -> (i32, i32) {
    %c0_i32 = arith.constant 0 : i32
    %c0_i32_0 = arith.constant 0 : i32
    %c0_i32_1 = arith.constant 0 : i32
    return %c0_i32, %c0_i32_0 : i32, i32
  }
  func.func @transform_2(%arg0: i32) -> (i32, i32) {
    %c0_i32 = arith.constant 0 : i32
    %c0_i32_0 = arith.constant 0 : i32
    return %arg0, %c0_i32 : i32, i32
  }
}

</mosaic_0001>

<llo_original>
// kernel: embedding_lookup.1
$region0: #{embedding_lookup.1}
  #allocation0 [shape = 'u32[]', space=smem, size = 0x4, offset = 0x4, fixed_abs, tag = 'smem constant byte address 0x4 - core index']
  #allocation1 [shape = 'u32[144,128]{1,0:T(1,128)}', space=vmem, size = 0x12000, scoped, tag = 'internal scratch']
  %s0 = inlined_call_operand.vmem [shape: s32[16,1], index: 0, kind: input, shape index: {}]
  %s1 = inlined_call_operand.vmem [shape: f32[64,128], index: 1, kind: input, shape index: {}]
  %s2 = inlined_call_operand.vmem [shape: f32[16,128], index: 2, kind: output, shape index: {}]
  %s3 = sld [smem:[#allocation0]]
  $region18: #{embedding_lookup.1} parent=0
    _
  %s5 = ssub.s32 1, %s3
  %s6 = scalar_select 0, %s5, %s3
  // Predicated region
  $region2: #{embedding_lookup.1} parent=0 // pred_check
    _
  $region3: #{embedding_lookup.1} parent=0 // pred_check_branch
    %8 = sbr.rel (0) target = $region5
  $region4: #{embedding_lookup.1} parent=0 // pred_region
    _
  $region5: #{embedding_lookup.1} parent=0 // pred_fallthru
    _
  // Predicated region
  $region6: #{embedding_lookup.1} parent=0 // pred_check
    _
  $region7: #{embedding_lookup.1} parent=0 // pred_check_branch
    %10 = sbr.rel (0) target = $region9
  $region8: #{embedding_lookup.1} parent=0 // pred_region
    _
  $region9: #{embedding_lookup.1} parent=0 // pred_fallthru
    _
  %v11 = vld [vmem:[%s0] sm:$0xff]
  %v12 = vld [vmem:[%s0 + $0x8] sm:$0xff]
  %v13 = vlaneseq
  %v14 = vand.u32 %v13, 127
  %15 = vset.pattern.permute.xlu0 0
  %16 = vperm.xlu0 %15, %v11
  %v17 = vpop.permute.xlu0 %16
  %18 = vset.pattern.permute.xlu0 0
  %19 = vperm.xlu0 %18, %v12
  %v20 = vpop.permute.xlu0 %19
  %vm21 = vcmp.eq.s32.totalorder %v14, %v17
  %vm22 = vcmp.eq.s32.totalorder %v14, %v20
  %v23 = vsel %vm21, 1, 0
  %v24 = vsel %vm22, 1, 0
  %v25 = vcvt.s32.f32 %v23
  %v26 = vcvt.s32.f32 %v24
  %v27 = vld [vmem:[%s1] sm:$0xff]
  %v28 = vld [vmem:[%s1 + $0x8] sm:$0xff]
  %v29 = vld [vmem:[%s1 + $0x10] sm:$0xff]
  %v30 = vld [vmem:[%s1 + $0x18] sm:$0xff]
  %v31 = vld [vmem:[%s1 + $0x20] sm:$0xff]
  %v32 = vld [vmem:[%s1 + $0x28] sm:$0xff]
  %v33 = vld [vmem:[%s1 + $0x30] sm:$0xff]
  %v34 = vld [vmem:[%s1 + $0x38] sm:$0xff]
  %vm35 = vcmask 523264
  %v37 = vsel %vm35, %v25, 0
  %v40 = vsel %vm35, %v26, 0
  %42 = vmatprep.subr.mxu0 0.0
  %v43 = vand.u32 %v27, 4294901760
  %44 = vmatpush1.msra.mxu0 %v43
  %45 = vmatprep.subr.mxu0 0.0
  %v46 = vand.u32 %v28, 4294901760
  %47 = vmatpush1.msra.mxu0 %v46
  %48 = vmatprep.subr.mxu0 0.0
  %v49 = vand.u32 %v29, 4294901760
  %50 = vmatpush1.msra.mxu0 %v49
  %51 = vmatprep.subr.mxu0 0.0
  %v52 = vand.u32 %v30, 4294901760
  %53 = vmatpush1.msra.mxu0 %v52
  %54 = vmatprep.subr.mxu0 0.0
  %v55 = vand.u32 %v31, 4294901760
  %56 = vmatpush1.msra.mxu0 %v55
  %57 = vmatprep.subr.mxu0 0.0
  %v58 = vand.u32 %v32, 4294901760
  %59 = vmatpush1.msra.mxu0 %v58
  %60 = vmatprep.subr.mxu0 0.0
  %v61 = vand.u32 %v33, 4294901760
  %62 = vmatpush1.msra.mxu0 %v61
  %63 = vmatprep.subr.mxu0 0.0
  %v64 = vand.u32 %v34, 4294901760
  %65 = vmatpush1.msra.mxu0 %v64
  %66 = vmatprep.subr.mxu0 0.0
  %67 = vmatpush1.msra.mxu0 0.0
  %68 = vmatprep.subr.mxu0 0.0
  %69 = vmatpush1.msra.mxu0 0.0
  %70 = vmatprep.subr.mxu0 0.0
  %71 = vmatpush1.msra.mxu0 0.0
  %72 = vmatprep.subr.mxu0 0.0
  %73 = vmatpush1.msra.mxu0 0.0
  %74 = vmatprep.subr.mxu0 0.0
  %75 = vmatpush1.msra.mxu0 0.0
  %76 = vmatprep.subr.mxu0 0.0
  %77 = vmatpush1.msra.mxu0 0.0
  %78 = vmatprep.subr.mxu0 0.0
  %79 = vmatpush1.msra.mxu0 0.0
  %80 = vmatprep.subr.mxu0 0.0
  %81 = vmatpush1.msra.mxu0 0.0
  %82 = vmatprep.subr.mxu0 0.0
  %83 = vmatpush1.msra.mxu0 0.0
  %84 = vmatprep.subr.mxu0 0.0
  %85 = vmatpush1.msra.mxu0 0.0
  %86 = vmatprep.subr.mxu0 0.0
  %87 = vmatpush1.msra.mxu0 0.0
  %88 = vmatprep.subr.mxu0 0.0
  %89 = vmatpush1.msra.mxu0 0.0
  %90 = vmatprep.subr.mxu0 0.0
  %91 = vmatpush1.msra.mxu0 0.0
  %92 = vmatprep.subr.mxu0 0.0
  %93 = vmatpush1.msra.mxu0 0.0
  %94 = vmatprep.subr.mxu0 0.0
  %95 = vmatpush1.msra.mxu0 0.0
  %96 = vmatprep.subr.mxu0 0.0
  %97 = vmatpush1.msra.mxu0 0.0
  %98 = vmatprep.subr.mxu0 0.0
  %99 = vmatpush1.msra.mxu0 0.0
  %100 = vmatprep.subr.mxu0 0.0
  %101 = vmatpush1.msra.mxu0 0.0
  %102 = vmatprep.subr.mxu0 0.0
  %103 = vmatpush1.msra.mxu0 0.0
  %104 = vmatprep.subr.mxu0 0.0
  %105 = vmatpush1.msra.mxu0 0.0
  %106 = vmatprep.subr.mxu0 0.0
  %107 = vmatpush1.msra.mxu0 0.0
  %108 = vmatprep.subr.mxu0 0.0
  %109 = vmatpush1.msra.mxu0 0.0
  %110 = vmatprep.subr.mxu0 0.0
  %111 = vmatpush1.msra.mxu0 0.0
  %112 = vmatprep.subr.mxu0 0.0
  %113 = vmatpush1.msra.mxu0 0.0
  %114 = vmatprep.mubr.f32.mxu0 0.0
  %v115 = vand.u32 %v37, 4294901760
  %v116 = vsub.f32 %v37, %v115
  %v117 = vand.u32 %v116, 4294901760
  %v118 = vsub.f32 %v116, %v117
  %v119 = vand.u32 %v118, 4294901760
  %120 = vmatmul.mubr.f32.gmra.mrb[0].mxu0 %v119
  %v121 = vpop.f32.mrb[0].mxu0
  %v122 = vadd.f32 0.0, %v121
  %v123 = vpop.f32.mrb[0].mxu0
  %124 = vmatprep.mubr.f32.mxu0 0.0
  %v125 = vand.u32 %v40, 4294901760
  %v126 = vsub.f32 %v40, %v125
  %v127 = vand.u32 %v126, 4294901760
  %v128 = vsub.f32 %v126, %v127
  %v129 = vand.u32 %v128, 4294901760
  %130 = vmatmul.mubr.f32.gmra.mrb[0].mxu0 %v129
  %v131 = vpop.f32.mrb[0].mxu0
  %v132 = vadd.f32 0.0, %v131
  %v133 = vpop.f32.mrb[0].mxu0
  %134 = vdwg.mxu0
  %135 = vmatprep.subr.mxu0 0.0
  %v136 = vand.u32 %v27, 4294901760
  %v137 = vsub.f32 %v27, %v136
  %v138 = vand.u32 %v137, 4294901760
  %v139 = vsub.f32 %v137, %v138
  %v140 = vand.u32 %v139, 4294901760
  %141 = vmatpush1.msra.mxu0 %v140
  %142 = vmatprep.subr.mxu0 0.0
  %v143 = vand.u32 %v28, 4294901760
  %v144 = vsub.f32 %v28, %v143
  %v145 = vand.u32 %v144, 4294901760
  %v146 = vsub.f32 %v144, %v145
  %v147 = vand.u32 %v146, 4294901760
  %148 = vmatpush1.msra.mxu0 %v147
  %149 = vmatprep.subr.mxu0 0.0
  %v150 = vand.u32 %v29, 4294901760
  %v151 = vsub.f32 %v29, %v150
  %v152 = vand.u32 %v151, 4294901760
  %v153 = vsub.f32 %v151, %v152
  %v154 = vand.u32 %v153, 4294901760
  %155 = vmatpush1.msra.mxu0 %v154
  %156 = vmatprep.subr.mxu0 0.0
  %v157 = vand.u32 %v30, 4294901760
  %v158 = vsub.f32 %v30, %v157
  %v159 = vand.u32 %v158, 4294901760
  %v160 = vsub.f32 %v158, %v159
  %v161 = vand.u32 %v160, 4294901760
  %162 = vmatpush1.msra.mxu0 %v161
  %163 = vmatprep.subr.mxu0 0.0
  %v164 = vand.u32 %v31, 4294901760
  %v165 = vsub.f32 %v31, %v164
  %v166 = vand.u32 %v165, 4294901760
  %v167 = vsub.f32 %v165, %v166
  %v168 = vand.u32 %v167, 4294901760
  %169 = vmatpush1.msra.mxu0 %v168
  %170 = vmatprep.subr.mxu0 0.0
  %v171 = vand.u32 %v32, 4294901760
  %v172 = vsub.f32 %v32, %v171
  %v173 = vand.u32 %v172, 4294901760
  %v174 = vsub.f32 %v172, %v173
  %v175 = vand.u32 %v174, 4294901760
  %176 = vmatpush1.msra.mxu0 %v175
  %177 = vmatprep.subr.mxu0 0.0
  %v178 = vand.u32 %v33, 4294901760
  %v179 = vsub.f32 %v33, %v178
  %v180 = vand.u32 %v179, 4294901760
  %v181 = vsub.f32 %v179, %v180
  %v182 = vand.u32 %v181, 4294901760
  %183 = vmatpush1.msra.mxu0 %v182
  %184 = vmatprep.subr.mxu0 0.0
  %v185 = vand.u32 %v34, 4294901760
  %v186 = vsub.f32 %v34, %v185
  %v187 = vand.u32 %v186, 4294901760
  %v188 = vsub.f32 %v186, %v187
  %v189 = vand.u32 %v188, 4294901760
  %190 = vmatpush1.msra.mxu0 %v189
  %191 = vmatprep.subr.mxu0 0.0
  %192 = vmatpush1.msra.mxu0 0.0
  %193 = vmatprep.subr.mxu0 0.0
  %194 = vmatpush1.msra.mxu0 0.0
  %195 = vmatprep.subr.mxu0 0.0
  %196 = vmatpush1.msra.mxu0 0.0
  %197 = vmatprep.subr.mxu0 0.0
  %198 = vmatpush1.msra.mxu0 0.0
  %199 = vmatprep.subr.mxu0 0.0
  %200 = vmatpush1.msra.mxu0 0.0
  %201 = vmatprep.subr.mxu0 0.0
  %202 = vmatpush1.msra.mxu0 0.0
  %203 = vmatprep.subr.mxu0 0.0
  %204 = vmatpush1.msra.mxu0 0.0
  %205 = vmatprep.subr.mxu0 0.0
  %206 = vmatpush1.msra.mxu0 0.0
  %207 = vmatprep.subr.mxu0 0.0
  %208 = vmatpush1.msra.mxu0 0.0
  %209 = vmatprep.subr.mxu0 0.0
  %210 = vmatpush1.msra.mxu0 0.0
  %211 = vmatprep.subr.mxu0 0.0
  %212 = vmatpush1.msra.mxu0 0.0
  %213 = vmatprep.subr.mxu0 0.0
  %214 = vmatpush1.msra.mxu0 0.0
  %215 = vmatprep.subr.mxu0 0.0
  %216 = vmatpush1.msra.mxu0 0.0
  %217 = vmatprep.subr.mxu0 0.0
  %218 = vmatpush1.msra.mxu0 0.0
  %219 = vmatprep.subr.mxu0 0.0
  %220 = vmatpush1.msra.mxu0 0.0
  %221 = vmatprep.subr.mxu0 0.0
  %222 = vmatpush1.msra.mxu0 0.0
  %223 = vmatprep.subr.mxu0 0.0
  %224 = vmatpush1.msra.mxu0 0.0
  %225 = vmatprep.subr.mxu0 0.0
  %226 = vmatpush1.msra.mxu0 0.0
  %227 = vmatprep.subr.mxu0 0.0
  %228 = vmatpush1.msra.mxu0 0.0
  %229 = vmatprep.subr.mxu0 0.0
  %230 = vmatpush1.msra.mxu0 0.0
  %231 = vmatprep.subr.mxu0 0.0
  %232 = vmatpush1.msra.mxu0 0.0
  %233 = vmatprep.subr.mxu0 0.0
  %234 = vmatpush1.msra.mxu0 0.0
  %235 = vmatprep.subr.mxu0 0.0
  %236 = vmatpush1.msra.mxu0 0.0
  %237 = vmatprep.subr.mxu0 0.0
  %238 = vmatpush1.msra.mxu0 0.0
  %239 = vmatprep.mubr.f32.mxu0 0.0
  %v240 = vand.u32 %v37, 4294901760
  %241 = vmatmul.mubr.f32.gmra.mrb[0].mxu0 %v240
  %v242 = vpop.f32.mrb[0].mxu0
  %v243 = vadd.f32 %v122, %v242
  %v244 = vpop.f32.mrb[0].mxu0
  %245 = vmatprep.mubr.f32.mxu0 0.0
  %v246 = vand.u32 %v40, 4294901760
  %247 = vmatmul.mubr.f32.gmra.mrb[0].mxu0 %v246
  %v248 = vpop.f32.mrb[0].mxu0
  %v249 = vadd.f32 %v132, %v248
  %v250 = vpop.f32.mrb[0].mxu0
  %251 = vdwg.mxu0
  %252 = vmatprep.subr.mxu0 0.0
  %v253 = vand.u32 %v27, 4294901760
  %v254 = vsub.f32 %v27, %v253
  %255 = vmatpush1.msra.mxu0 %v254
  %256 = vmatprep.subr.mxu0 0.0
  %v257 = vand.u32 %v28, 4294901760
  %v258 = vsub.f32 %v28, %v257
  %259 = vmatpush1.msra.mxu0 %v258
  %260 = vmatprep.subr.mxu0 0.0
  %v261 = vand.u32 %v29, 4294901760
  %v262 = vsub.f32 %v29, %v261
  %263 = vmatpush1.msra.mxu0 %v262
  %264 = vmatprep.subr.mxu0 0.0
  %v265 = vand.u32 %v30, 4294901760
  %v266 = vsub.f32 %v30, %v265
  %267 = vmatpush1.msra.mxu0 %v266
  %268 = vmatprep.subr.mxu0 0.0
  %v269 = vand.u32 %v31, 4294901760
  %v270 = vsub.f32 %v31, %v269
  %271 = vmatpush1.msra.mxu0 %v270
  %272 = vmatprep.subr.mxu0 0.0
  %v273 = vand.u32 %v32, 4294901760
  %v274 = vsub.f32 %v32, %v273
  %275 = vmatpush1.msra.mxu0 %v274
  %276 = vmatprep.subr.mxu0 0.0
  %v277 = vand.u32 %v33, 4294901760
  %v278 = vsub.f32 %v33, %v277
  %279 = vmatpush1.msra.mxu0 %v278
  %280 = vmatprep.subr.mxu0 0.0
  %v281 = vand.u32 %v34, 4294901760
  %v282 = vsub.f32 %v34, %v281
  %283 = vmatpush1.msra.mxu0 %v282
  %284 = vmatprep.subr.mxu0 0.0
  %285 = vmatpush1.msra.mxu0 0.0
  %286 = vmatprep.subr.mxu0 0.0
  %287 = vmatpush1.msra.mxu0 0.0
  %288 = vmatprep.subr.mxu0 0.0
  %289 = vmatpush1.msra.mxu0 0.0
  %290 = vmatprep.subr.mxu0 0.0
  %291 = vmatpush1.msra.mxu0 0.0
  %292 = vmatprep.subr.mxu0 0.0
  %293 = vmatpush1.msra.mxu0 0.0
  %294 = vmatprep.subr.mxu0 0.0
  %295 = vmatpush1.msra.mxu0 0.0
  %296 = vmatprep.subr.mxu0 0.0
  %297 = vmatpush1.msra.mxu0 0.0
  %298 = vmatprep.subr.mxu0 0.0
  %299 = vmatpush1.msra.mxu0 0.0
  %300 = vmatprep.subr.mxu0 0.0
  %301 = vmatpush1.msra.mxu0 0.0
  %302 = vmatprep.subr.mxu0 0.0
  %303 = vmatpush1.msra.mxu0 0.0
  %304 = vmatprep.subr.mxu0 0.0
  %305 = vmatpush1.msra.mxu0 0.0
  %306 = vmatprep.subr.mxu0 0.0
  %307 = vmatpush1.msra.mxu0 0.0
  %308 = vmatprep.subr.mxu0 0.0
  %309 = vmatpush1.msra.mxu0 0.0
  %310 = vmatprep.subr.mxu0 0.0
  %311 = vmatpush1.msra.mxu0 0.0
  %312 = vmatprep.subr.mxu0 0.0
  %313 = vmatpush1.msra.mxu0 0.0
  %314 = vmatprep.subr.mxu0 0.0
  %315 = vmatpush1.msra.mxu0 0.0
  %316 = vmatprep.subr.mxu0 0.0
  %317 = vmatpush1.msra.mxu0 0.0
  %318 = vmatprep.subr.mxu0 0.0
  %319 = vmatpush1.msra.mxu0 0.0
  %320 = vmatprep.subr.mxu0 0.0
  %321 = vmatpush1.msra.mxu0 0.0
  %322 = vmatprep.subr.mxu0 0.0
  %323 = vmatpush1.msra.mxu0 0.0
  %324 = vmatprep.subr.mxu0 0.0
  %325 = vmatpush1.msra.mxu0 0.0
  %326 = vmatprep.subr.mxu0 0.0
  %327 = vmatpush1.msra.mxu0 0.0
  %328 = vmatprep.subr.mxu0 0.0
  %329 = vmatpush1.msra.mxu0 0.0
  %330 = vmatprep.subr.mxu0 0.0
  %331 = vmatpush1.msra.mxu0 0.0
  %332 = vmatprep.mubr.f32.mxu0 0.0
  %v333 = vand.u32 %v37, 4294901760
  %v334 = vsub.f32 %v37, %v333
  %335 = vmatmul.mubr.f32.gmra.mrb[0].mxu0 %v334
  %v336 = vpop.f32.mrb[0].mxu0
  %v337 = vadd.f32 %v243, %v336
  %v338 = vpop.f32.mrb[0].mxu0
  %339 = vmatprep.mubr.f32.mxu0 0.0
  %v340 = vand.u32 %v40, 4294901760
  %v341 = vsub.f32 %v40, %v340
  %342 = vmatmul.mubr.f32.gmra.mrb[0].mxu0 %v341
  %v343 = vpop.f32.mrb[0].mxu0
  %v344 = vadd.f32 %v249, %v343
  %v345 = vpop.f32.mrb[0].mxu0
  %346 = vdwg.mxu0
  %347 = vmatprep.subr.mxu0 0.0
  %v348 = vand.u32 %v27, 4294901760
  %349 = vmatpush1.msra.mxu0 %v348
  %350 = vmatprep.subr.mxu0 0.0
  %v351 = vand.u32 %v28, 4294901760
  %352 = vmatpush1.msra.mxu0 %v351
  %353 = vmatprep.subr.mxu0 0.0
  %v354 = vand.u32 %v29, 4294901760
  %355 = vmatpush1.msra.mxu0 %v354
  %356 = vmatprep.subr.mxu0 0.0
  %v357 = vand.u32 %v30, 4294901760
  %358 = vmatpush1.msra.mxu0 %v357
  %359 = vmatprep.subr.mxu0 0.0
  %v360 = vand.u32 %v31, 4294901760
  %361 = vmatpush1.msra.mxu0 %v360
  %362 = vmatprep.subr.mxu0 0.0
  %v363 = vand.u32 %v32, 4294901760
  %364 = vmatpush1.msra.mxu0 %v363
  %365 = vmatprep.subr.mxu0 0.0
  %v366 = vand.u32 %v33, 4294901760
  %367 = vmatpush1.msra.mxu0 %v366
  %368 = vmatprep.subr.mxu0 0.0
  %v369 = vand.u32 %v34, 4294901760
  %370 = vmatpush1.msra.mxu0 %v369
  %371 = vmatprep.subr.mxu0 0.0
  %372 = vmatpush1.msra.mxu0 0.0
  %373 = vmatprep.subr.mxu0 0.0
  %374 = vmatpush1.msra.mxu0 0.0
  %375 = vmatprep.subr.mxu0 0.0
  %376 = vmatpush1.msra.mxu0 0.0
  %377 = vmatprep.subr.mxu0 0.0
  %378 = vmatpush1.msra.mxu0 0.0
  %379 = vmatprep.subr.mxu0 0.0
  %380 = vmatpush1.msra.mxu0 0.0
  %381 = vmatprep.subr.mxu0 0.0
  %382 = vmatpush1.msra.mxu0 0.0
  %383 = vmatprep.subr.mxu0 0.0
  %384 = vmatpush1.msra.mxu0 0.0
  %385 = vmatprep.subr.mxu0 0.0
  %386 = vmatpush1.msra.mxu0 0.0
  %387 = vmatprep.subr.mxu0 0.0
  %388 = vmatpush1.msra.mxu0 0.0
  %389 = vmatprep.subr.mxu0 0.0
  %390 = vmatpush1.msra.mxu0 0.0
  %391 = vmatprep.subr.mxu0 0.0
  %392 = vmatpush1.msra.mxu0 0.0
  %393 = vmatprep.subr.mxu0 0.0
  %394 = vmatpush1.msra.mxu0 0.0
  %395 = vmatprep.subr.mxu0 0.0
  %396 = vmatpush1.msra.mxu0 0.0
  %397 = vmatprep.subr.mxu0 0.0
  %398 = vmatpush1.msra.mxu0 0.0
  %399 = vmatprep.subr.mxu0 0.0
  %400 = vmatpush1.msra.mxu0 0.0
  %401 = vmatprep.subr.mxu0 0.0
  %402 = vmatpush1.msra.mxu0 0.0
  %403 = vmatprep.subr.mxu0 0.0
  %404 = vmatpush1.msra.mxu0 0.0
  %405 = vmatprep.subr.mxu0 0.0
  %406 = vmatpush1.msra.mxu0 0.0
  %407 = vmatprep.subr.mxu0 0.0
  %408 = vmatpush1.msra.mxu0 0.0
  %409 = vmatprep.subr.mxu0 0.0
  %410 = vmatpush1.msra.mxu0 0.0
  %411 = vmatprep.subr.mxu0 0.0
  %412 = vmatpush1.msra.mxu0 0.0
  %413 = vmatprep.subr.mxu0 0.0
  %414 = vmatpush1.msra.mxu0 0.0
  %415 = vmatprep.subr.mxu0 0.0
  %416 = vmatpush1.msra.mxu0 0.0
  %417 = vmatprep.subr.mxu0 0.0
  %418 = vmatpush1.msra.mxu0 0.0
  %419 = vmatprep.mubr.f32.mxu0 0.0
  %v420 = vand.u32 %v37, 4294901760
  %v421 = vsub.f32 %v37, %v420
  %v422 = vand.u32 %v421, 4294901760
  %423 = vmatmul.mubr.f32.gmra.mrb[0].mxu0 %v422
  %v424 = vpop.f32.mrb[0].mxu0
  %v425 = vadd.f32 %v337, %v424
  %v426 = vpop.f32.mrb[0].mxu0
  %427 = vmatprep.mubr.f32.mxu0 0.0
  %v428 = vand.u32 %v40, 4294901760
  %v429 = vsub.f32 %v40, %v428
  %v430 = vand.u32 %v429, 4294901760
  %431 = vmatmul.mubr.f32.gmra.mrb[0].mxu0 %v430
  %v432 = vpop.f32.mrb[0].mxu0
  %v433 = vadd.f32 %v344, %v432
  %v434 = vpop.f32.mrb[0].mxu0
  %435 = vdwg.mxu0
  %436 = vmatprep.subr.mxu0 0.0
  %v437 = vand.u32 %v27, 4294901760
  %v438 = vsub.f32 %v27, %v437
  %v439 = vand.u32 %v438, 4294901760
  %440 = vmatpush1.msra.mxu0 %v439
  %441 = vmatprep.subr.mxu0 0.0
  %v442 = vand.u32 %v28, 4294901760
  %v443 = vsub.f32 %v28, %v442
  %v444 = vand.u32 %v443, 4294901760
  %445 = vmatpush1.msra.mxu0 %v444
  %446 = vmatprep.subr.mxu0 0.0
  %v447 = vand.u32 %v29, 4294901760
  %v448 = vsub.f32 %v29, %v447
  %v449 = vand.u32 %v448, 4294901760
  %450 = vmatpush1.msra.mxu0 %v449
  %451 = vmatprep.subr.mxu0 0.0
  %v452 = vand.u32 %v30, 4294901760
  %v453 = vsub.f32 %v30, %v452
  %v454 = vand.u32 %v453, 4294901760
  %455 = vmatpush1.msra.mxu0 %v454
  %456 = vmatprep.subr.mxu0 0.0
  %v457 = vand.u32 %v31, 4294901760
  %v458 = vsub.f32 %v31, %v457
  %v459 = vand.u32 %v458, 4294901760
  %460 = vmatpush1.msra.mxu0 %v459
  %461 = vmatprep.subr.mxu0 0.0
  %v462 = vand.u32 %v32, 4294901760
  %v463 = vsub.f32 %v32, %v462
  %v464 = vand.u32 %v463, 4294901760
  %465 = vmatpush1.msra.mxu0 %v464
  %466 = vmatprep.subr.mxu0 0.0
  %v467 = vand.u32 %v33, 4294901760
  %v468 = vsub.f32 %v33, %v467
  %v469 = vand.u32 %v468, 4294901760
  %470 = vmatpush1.msra.mxu0 %v469
  %471 = vmatprep.subr.mxu0 0.0
  %v472 = vand.u32 %v34, 4294901760
  %v473 = vsub.f32 %v34, %v472
  %v474 = vand.u32 %v473, 4294901760
  %475 = vmatpush1.msra.mxu0 %v474
  %476 = vmatprep.subr.mxu0 0.0
  %477 = vmatpush1.msra.mxu0 0.0
  %478 = vmatprep.subr.mxu0 0.0
  %479 = vmatpush1.msra.mxu0 0.0
  %480 = vmatprep.subr.mxu0 0.0
  %481 = vmatpush1.msra.mxu0 0.0
  %482 = vmatprep.subr.mxu0 0.0
  %483 = vmatpush1.msra.mxu0 0.0
  %484 = vmatprep.subr.mxu0 0.0
  %485 = vmatpush1.msra.mxu0 0.0
  %486 = vmatprep.subr.mxu0 0.0
  %487 = vmatpush1.msra.mxu0 0.0
  %488 = vmatprep.subr.mxu0 0.0
  %489 = vmatpush1.msra.mxu0 0.0
  %490 = vmatprep.subr.mxu0 0.0
  %491 = vmatpush1.msra.mxu0 0.0
  %492 = vmatprep.subr.mxu0 0.0
  %493 = vmatpush1.msra.mxu0 0.0
  %494 = vmatprep.subr.mxu0 0.0
  %495 = vmatpush1.msra.mxu0 0.0
  %496 = vmatprep.subr.mxu0 0.0
  %497 = vmatpush1.msra.mxu0 0.0
  %498 = vmatprep.subr.mxu0 0.0
  %499 = vmatpush1.msra.mxu0 0.0
  %500 = vmatprep.subr.mxu0 0.0
  %501 = vmatpush1.msra.mxu0 0.0
  %502 = vmatprep.subr.mxu0 0.0
  %503 = vmatpush1.msra.mxu0 0.0
  %504 = vmatprep.subr.mxu0 0.0
  %505 = vmatpush1.msra.mxu0 0.0
  %506 = vmatprep.subr.mxu0 0.0
  %507 = vmatpush1.msra.mxu0 0.0
  %508 = vmatprep.subr.mxu0 0.0
  %509 = vmatpush1.msra.mxu0 0.0
  %510 = vmatprep.subr.mxu0 0.0
  %511 = vmatpush1.msra.mxu0 0.0
  %512 = vmatprep.subr.mxu0 0.0
  %513 = vmatpush1.msra.mxu0 0.0
  %514 = vmatprep.subr.mxu0 0.0
  %515 = vmatpush1.msra.mxu0 0.0
  %516 = vmatprep.subr.mxu0 0.0
  %517 = vmatpush1.msra.mxu0 0.0
  %518 = vmatprep.subr.mxu0 0.0
  %519 = vmatpush1.msra.mxu0 0.0
  %520 = vmatprep.subr.mxu0 0.0
  %521 = vmatpush1.msra.mxu0 0.0
  %522 = vmatprep.subr.mxu0 0.0
  %523 = vmatpush1.msra.mxu0 0.0
  %524 = vmatprep.mubr.f32.mxu0 0.0
  %v525 = vand.u32 %v37, 4294901760
  %526 = vmatmul.mubr.f32.gmra.mrb[0].mxu0 %v525
  %v527 = vpop.f32.mrb[0].mxu0
  %v528 = vadd.f32 %v425, %v527
  %v529 = vpop.f32.mrb[0].mxu0
  %530 = vmatprep.mubr.f32.mxu0 0.0
  %v531 = vand.u32 %v40, 4294901760
  %532 = vmatmul.mubr.f32.gmra.mrb[0].mxu0 %v531
  %v533 = vpop.f32.mrb[0].mxu0
  %v534 = vadd.f32 %v433, %v533
  %v535 = vpop.f32.mrb[0].mxu0
  %536 = vdwg.mxu0
  %537 = vmatprep.subr.mxu0 0.0
  %v538 = vand.u32 %v27, 4294901760
  %539 = vmatpush1.msra.mxu0 %v538
  %540 = vmatprep.subr.mxu0 0.0
  %v541 = vand.u32 %v28, 4294901760
  %542 = vmatpush1.msra.mxu0 %v541
  %543 = vmatprep.subr.mxu0 0.0
  %v544 = vand.u32 %v29, 4294901760
  %545 = vmatpush1.msra.mxu0 %v544
  %546 = vmatprep.subr.mxu0 0.0
  %v547 = vand.u32 %v30, 4294901760
  %548 = vmatpush1.msra.mxu0 %v547
  %549 = vmatprep.subr.mxu0 0.0
  %v550 = vand.u32 %v31, 4294901760
  %551 = vmatpush1.msra.mxu0 %v550
  %552 = vmatprep.subr.mxu0 0.0
  %v553 = vand.u32 %v32, 4294901760
  %554 = vmatpush1.msra.mxu0 %v553
  %555 = vmatprep.subr.mxu0 0.0
  %v556 = vand.u32 %v33, 4294901760
  %557 = vmatpush1.msra.mxu0 %v556
  %558 = vmatprep.subr.mxu0 0.0
  %v559 = vand.u32 %v34, 4294901760
  %560 = vmatpush1.msra.mxu0 %v559
  %561 = vmatprep.subr.mxu0 0.0
  %562 = vmatpush1.msra.mxu0 0.0
  %563 = vmatprep.subr.mxu0 0.0
  %564 = vmatpush1.msra.mxu0 0.0
  %565 = vmatprep.subr.mxu0 0.0
  %566 = vmatpush1.msra.mxu0 0.0
  %567 = vmatprep.subr.mxu0 0.0
  %568 = vmatpush1.msra.mxu0 0.0
  %569 = vmatprep.subr.mxu0 0.0
  %570 = vmatpush1.msra.mxu0 0.0
  %571 = vmatprep.subr.mxu0 0.0
  %572 = vmatpush1.msra.mxu0 0.0
  %573 = vmatprep.subr.mxu0 0.0
  %574 = vmatpush1.msra.mxu0 0.0
  %575 = vmatprep.subr.mxu0 0.0
  %576 = vmatpush1.msra.mxu0 0.0
  %577 = vmatprep.subr.mxu0 0.0
  %578 = vmatpush1.msra.mxu0 0.0
  %579 = vmatprep.subr.mxu0 0.0
  %580 = vmatpush1.msra.mxu0 0.0
  %581 = vmatprep.subr.mxu0 0.0
  %582 = vmatpush1.msra.mxu0 0.0
  %583 = vmatprep.subr.mxu0 0.0
  %584 = vmatpush1.msra.mxu0 0.0
  %585 = vmatprep.subr.mxu0 0.0
  %586 = vmatpush1.msra.mxu0 0.0
  %587 = vmatprep.subr.mxu0 0.0
  %588 = vmatpush1.msra.mxu0 0.0
  %589 = vmatprep.subr.mxu0 0.0
  %590 = vmatpush1.msra.mxu0 0.0
  %591 = vmatprep.subr.mxu0 0.0
  %592 = vmatpush1.msra.mxu0 0.0
  %593 = vmatprep.subr.mxu0 0.0
  %594 = vmatpush1.msra.mxu0 0.0
  %595 = vmatprep.subr.mxu0 0.0
  %596 = vmatpush1.msra.mxu0 0.0
  %597 = vmatprep.subr.mxu0 0.0
  %598 = vmatpush1.msra.mxu0 0.0
  %599 = vmatprep.subr.mxu0 0.0
  %600 = vmatpush1.msra.mxu0 0.0
  %601 = vmatprep.subr.mxu0 0.0
  %602 = vmatpush1.msra.mxu0 0.0
  %603 = vmatprep.subr.mxu0 0.0
  %604 = vmatpush1.msra.mxu0 0.0
  %605 = vmatprep.subr.mxu0 0.0
  %606 = vmatpush1.msra.mxu0 0.0
  %607 = vmatprep.subr.mxu0 0.0
  %608 = vmatpush1.msra.mxu0 0.0
  %609 = vmatprep.mubr.f32.mxu0 0.0
  %v610 = vand.u32 %v37, 4294901760
  %611 = vmatmul.mubr.f32.gmra.mrb[0].mxu0 %v610
  %v612 = vpop.f32.mrb[0].mxu0
  %v613 = vadd.f32 %v528, %v612
  %v614 = vpop.f32.mrb[0].mxu0
  %615 = vmatprep.mubr.f32.mxu0 0.0
  %v616 = vand.u32 %v40, 4294901760
  %617 = vmatmul.mubr.f32.gmra.mrb[0].mxu0 %v616
  %v618 = vpop.f32.mrb[0].mxu0
  %v619 = vadd.f32 %v534, %v618
  %v620 = vpop.f32.mrb[0].mxu0
  %621 = vdwg.mxu0
  %622 = vst [vmem:[%s2] sm:$0xff] %v613
  %623 = vst [vmem:[%s2 + $0x8] sm:$0xff] %v619
  // Predicated region
  $region10: #{embedding_lookup.1} parent=0 // pred_check
    _
  $region11: #{embedding_lookup.1} parent=0 // pred_check_branch
    %625 = sbr.rel (0) target = $region13
  $region12: #{embedding_lookup.1} parent=0 // pred_region
    _
  $region13: #{embedding_lookup.1} parent=0 // pred_fallthru
    _
  // Predicated region
  $region14: #{embedding_lookup.1} parent=0 // pred_check
    _
  $region15: #{embedding_lookup.1} parent=0 // pred_check_branch
    %627 = sbr.rel (0) target = $region17
  $region16: #{embedding_lookup.1} parent=0 // pred_region
    _
  $region17: #{embedding_lookup.1} parent=0 // pred_fallthru
    _

</llo_original>
